<compile_context>
chip_gen: v6e
topology: v6e:2x2x1
jax: 0.10.0
libtpu: 0.0.40
codegen_flags: <defaults>
</compile_context>

<pallas_src>
from functools import partial

import jax
import jax.numpy as jnp
from jax import lax
from jax.experimental import pallas as pl
from jax.experimental.pallas import tpu as pltpu

_F32 = 4  # bytes per float32


def _round_up(v, m):
    return (v + m - 1) // m * m


def _vmem_capacity_bytes():
    try:
        cap = getattr(pltpu.get_tpu_info(), "vmem_capacity_bytes", None)
        if cap:
            return int(cap)
    except Exception:
        pass
    return 64 << 20  # conservative default (v7x per-TensorCore VMEM)


# --------------------------------- kernels ----------------------------------


def _cbn_fused_kernel(x_ref, g_ref, b_ref, o_ref, *, eps, inv_count):
    """Fused stats + apply.  x_ref/o_ref: (N, Ct, HWp); g_ref/b_ref: (N, Ct, 1)."""
    x = x_ref[...]
    # Per-channel sums over (batch, spatial); zero-padded lanes/channels add 0.
    s1 = jnp.sum(x, axis=(0, 2), keepdims=True)              # (1, Ct, 1)
    s2 = jnp.sum(x * x, axis=(0, 2), keepdims=True)          # (1, Ct, 1)
    mean = s1 * inv_count
    var = jnp.maximum(s2 * inv_count - mean * mean, 0.0)     # biased variance
    inv_std = lax.rsqrt(var + eps)
    # Normalization + conditional affine folded into one FMA over the slab.
    scale = g_ref[...] * inv_std                              # (N, Ct, 1)
    shift = b_ref[...] - scale * mean                         # (N, Ct, 1)
    o_ref[...] = x * scale + shift


def _cbn_stats_kernel(x_ref, s1_ref, s2_ref):
    """Two-phase pass 1: accumulate per-channel sum / sumsq over spatial chunks."""
    @pl.when(pl.program_id(1) == 0)
    def _():
        s1_ref[...] = jnp.zeros_like(s1_ref)
        s2_ref[...] = jnp.zeros_like(s2_ref)

    x = x_ref[...]                                            # (N, Ct, Sp)
    s1_ref[...] += jnp.sum(x, axis=(0, 2), keepdims=True)     # (1, Ct, 1)
    s2_ref[...] += jnp.sum(x * x, axis=(0, 2), keepdims=True)


def _cbn_apply_kernel(x_ref, scale_ref, shift_ref, o_ref):
    """Two-phase pass 2: lane-dense FMA with precomputed per-(n, c) scale/shift."""
    o_ref[...] = x_ref[...] * scale_ref[...] + shift_ref[...]


# ------------------------------ tile selection -------------------------------


def _channel_tiles(Cp):
    return sorted({d for d in range(8, Cp, 8) if Cp % d == 0} | {Cp})


def _gb_tile_bytes(N, ct):
    # Two (N, Ct, 1) f32 arrays, double-buffered; minor dims pad to (8k, 128).
    return 4 * N * _round_up(ct, 8) * 128 * _F32


def _fused_need_bytes(N, ct, HWp):
    slab = N * ct * HWp * _F32
    # 2 double-buffered input slabs + 2 output slabs + ~2 slab-sized in-kernel
    # temporaries + gamma/beta tiles + margin.
    return 6 * slab + _gb_tile_bytes(N, ct) + (2 << 20)


def _pick_fused_channel_tile(N, Cp, HWp, budget):
    fitting = [ct for ct in _channel_tiles(Cp)
               if _fused_need_bytes(N, ct, HWp) <= budget]
    if not fitting:
        return None
    # Prefer >=2 grid steps: keeps double-buffering alive and lets v7x's two
    # TensorCores split the "parallel" channel axis.
    multi = [ct for ct in fitting if Cp // ct >= 2]
    return max(multi) if multi else max(fitting)


def _two_phase_need_bytes(N, ct, sp):
    return 5 * N * ct * sp * _F32 + _gb_tile_bytes(N, ct) + (2 << 20)


def _pick_two_phase_tiles(N, Cp, HWp, budget):
    sp_cands = [d for d in range(128, HWp + 1, 128) if HWp % d == 0]
    best = None
    for ct in _channel_tiles(Cp):
        for sp in sp_cands:
            if _two_phase_need_bytes(N, ct, sp) > budget:
                continue
            multi = int(Cp // ct >= 2) + int(HWp // sp >= 2)
            key = (multi, N * ct * sp, sp)
            if best is None or key > best[0]:
                best = (key, ct, sp)
    if best is None:
        # TODO(synk): batch-axis chunking for the case where even an
        # (N, 8, 128) slab exceeds the VMEM budget.
        raise NotImplementedError(
            "ConditionalBatchNorm2d: minimum (N, 8, 128) slab exceeds the VMEM "
            "budget; batch-chunked statistics are not implemented.")
    return best[1], best[2]


# --------------------------------- wrapper -----------------------------------


def conditional_batchnorm2d(x, c, weight, bias, eps=1e-4, force_two_phase=False):
    """Training-mode forward of ConditionalBatchNorm2d.

    x: (N, C, H, W); c: (N, S); weight/bias: (S, C).  Returns (N, C, H, W).
    """
    N, C, H, W = x.shape
    HW = H * W
    HWp = _round_up(HW, 128)          # lane-dense loads/stores (no masked vst)
    Cp = _round_up(C, 8)              # sublane-aligned channel tiles

    xf = x.astype(jnp.float32).reshape(N, C, HW)
    if (Cp, HWp) != (C, HW):
        xf = jnp.pad(xf, ((0, 0), (0, Cp - C), (0, HWp - HW)))

    # Tiny (N,S)x(S,C) conditional matmul hoisted out of the bandwidth-bound
    # kernel (<<1% MXU utilisation, pure overhead in the inner loop).
    gamma = jnp.dot(c.astype(jnp.float32), weight.astype(jnp.float32))   # (N, C)
    beta = jnp.dot(c.astype(jnp.float32), bias.astype(jnp.float32))      # (N, C)
    if Cp != C:
        gamma = jnp.pad(gamma, ((0, 0), (0, Cp - C)))
        beta = jnp.pad(beta, ((0, 0), (0, Cp - C)))

    inv_count = 1.0 / float(N * HW)   # true element count (pads contribute 0)
    budget = max(int(0.55 * _vmem_capacity_bytes()), 24 << 20)

    ct = None if force_two_phase else _pick_fused_channel_tile(N, Cp, HWp, budget)

    if ct is not None:
        need = _fused_need_bytes(N, ct, HWp)
        out = pl.pallas_call(
            partial(_cbn_fused_kernel, eps=eps, inv_count=inv_count),
            out_shape=jax.ShapeDtypeStruct((N, Cp, HWp), jnp.float32),
            grid_spec=pltpu.PrefetchScalarGridSpec(
                num_scalar_prefetch=0,
                grid=(Cp // ct,),
                in_specs=[
                    pl.BlockSpec((N, ct, HWp), lambda i: (0, i, 0)),
                    pl.BlockSpec((N, ct, 1), lambda i: (0, i, 0)),
                    pl.BlockSpec((N, ct, 1), lambda i: (0, i, 0)),
                ],
                out_specs=pl.BlockSpec((N, ct, HWp), lambda i: (0, i, 0)),
            ),
            compiler_params=pltpu.CompilerParams(
                dimension_semantics=("parallel",),
                vmem_limit_bytes=int(max(need, 32 << 20)),
            ),
            cost_estimate=pl.CostEstimate(
                flops=5 * N * Cp * HWp,
                transcendentals=Cp,
                bytes_accessed=(2 * N * Cp * HWp + 4 * N * Cp) * _F32,
            ),
        )(xf, gamma[:, :, None], beta[:, :, None])
    else:
        ct, sp = _pick_two_phase_tiles(N, Cp, HWp, budget)
        vmem_limit = int(max(_two_phase_need_bytes(N, ct, sp), 32 << 20))
        grid = (Cp // ct, HWp // sp)

        # Pass 1: per-channel sum / sum-of-squares accumulated in the resident
        # (1, Ct, 1) output blocks across the spatial ("arbitrary") axis.
        s1, s2 = pl.pallas_call(
            _cbn_stats_kernel,
            out_shape=(jax.ShapeDtypeStruct((1, Cp, 1), jnp.float32),
                       jax.ShapeDtypeStruct((1, Cp, 1), jnp.float32)),
            grid_spec=pltpu.PrefetchScalarGridSpec(
                num_scalar_prefetch=0,
                grid=grid,
                in_specs=[pl.BlockSpec((N, ct, sp), lambda i, j: (0, i, j))],
                out_specs=[pl.BlockSpec((1, ct, 1), lambda i, j: (0, i, 0)),
                           pl.BlockSpec((1, ct, 1), lambda i, j: (0, i, 0))],
            ),
            compiler_params=pltpu.CompilerParams(
                dimension_semantics=("parallel", "arbitrary"),
                vmem_limit_bytes=vmem_limit,
            ),
        )(xf)

        mean = s1[0, :, 0] * inv_count                         # (Cp,)
        var = jnp.maximum(s2[0, :, 0] * inv_count - mean * mean, 0.0)
        inv_std = lax.rsqrt(var + eps)
        scale = gamma * inv_std[None, :]                       # (N, Cp)
        shift = beta - scale * mean[None, :]                   # (N, Cp)

        # Pass 2: lane-dense FMA apply, tiled over (channel, spatial).
        out = pl.pallas_call(
            _cbn_apply_kernel,
            out_shape=jax.ShapeDtypeStruct((N, Cp, HWp), jnp.float32),
            grid_spec=pltpu.PrefetchScalarGridSpec(
                num_scalar_prefetch=0,
                grid=grid,
                in_specs=[
                    pl.BlockSpec((N, ct, sp), lambda i, j: (0, i, j)),
                    pl.BlockSpec((N, ct, 1), lambda i, j: (0, i, 0)),
                    pl.BlockSpec((N, ct, 1), lambda i, j: (0, i, 0)),
                ],
                out_specs=pl.BlockSpec((N, ct, sp), lambda i, j: (0, i, j)),
            ),
            compiler_params=pltpu.CompilerParams(
                dimension_semantics=("parallel", "parallel"),
                vmem_limit_bytes=vmem_limit,
            ),
        )(xf, scale[:, :, None], shift[:, :, None])

    if (Cp, HWp) != (C, HW):
        out = out[:, :C, :HW]
    return out.reshape(N, C, H, W).astype(x.dtype)


# -------------------------------- reference ----------------------------------


def _reference(x, c, weight, bias, eps=1e-4):
    mean = jnp.mean(x, axis=(0, 2, 3), keepdims=True)
    var = jnp.mean((x - mean) ** 2, axis=(0, 2, 3), keepdims=True)
    h = (x - mean) / jnp.sqrt(var + eps)
    gamma = (c @ weight)[:, :, None, None]
    beta = (c @ bias)[:, :, None, None]
    return gamma * h + beta


if __name__ == "__main__":
    S = 10  # num_classes

    def run_case(keys, N, C, H, W, force_two_phase=False):
        kx, kc, kw, kb = keys
        x = jax.random.normal(kx, (N, C, H, W), dtype=jnp.float32)
        labels = jax.random.randint(kc, (N,), 0, S)
        c = jax.nn.one_hot(labels, S, dtype=jnp.float32)
        # Module init: weight = ones(S, C), bias = zeros(S, C); perturb slightly
        # so the conditional path is exercised.
        weight = jnp.ones((S, C), jnp.float32) + 0.1 * jax.random.normal(kw, (S, C), jnp.float32)
        bias = 0.1 * jax.random.normal(kb, (S, C), jnp.float32)

        y = conditional_batchnorm2d(x, c, weight, bias, eps=1e-4,
                                    force_two_phase=force_two_phase)
        y = jax.block_until_ready(y)
        y_ref = _reference(x, c, weight, bias, eps=1e-4)
        assert y.shape == x.shape, (y.shape, x.shape)
        assert jnp.allclose(y, y_ref, atol=2e-4, rtol=2e-4), (
            "mismatch vs reference", N, C, H, W, force_two_phase)

    keys = jax.random.split(jax.random.PRNGKey(0), 12)
    # Fused single-call path (channel-tiled grid).
    run_case(keys[0:4], N=2, C=4, H=16, W=16)
    # Two-phase stats-then-apply fallback (exercises the accumulating grid).
    run_case(keys[4:8], N=2, C=16, H=16, W=16, force_two_phase=True)
    # Non-128-multiple spatial size (lane-padding path, 7x7 feature map).
    run_case(keys[8:12], N=3, C=8, H=7, W=7)
    print("KERNEL_OK")
</pallas_src>

<mosaic_0001>
module attributes {stable_mosaic.version = 11 : i64} {
  func.func @_cbn_fused_kernel(%arg0: i32, %arg1: memref<2x8x256xf32, #tpu.memory_space<vmem>>, %arg2: memref<2x8x1xf32, #tpu.memory_space<vmem>>, %arg3: memref<2x8x1xf32, #tpu.memory_space<vmem>>, %arg4: memref<2x8x256xf32, #tpu.memory_space<vmem>>) attributes {dimension_semantics = [#tpu.dimension_semantics<parallel>], iteration_bounds = array<i64: 1>, scalar_prefetch = 0 : i64, scratch_operands = 0 : i64, tpu.core_type = #tpu.core_type<tc>, window_params = [{transform_indices = @transform_0, window_bounds = array<i64: 2, 8, 256>}, {transform_indices = @transform_1, window_bounds = array<i64: 2, 8, 1>}, {transform_indices = @transform_2, window_bounds = array<i64: 2, 8, 1>}, {transform_indices = @transform_3, window_bounds = array<i64: 2, 8, 256>}]} {
    %c0 = arith.constant 0 : index
    %c0_0 = arith.constant 0 : index
    %c0_1 = arith.constant 0 : index
    %0 = vector.load %arg1[%c0, %c0_0, %c0_1] : memref<2x8x256xf32, #tpu.memory_space<vmem>>, vector<2x8x256xf32>
    %cst = arith.constant dense<0.000000e+00> : vector<8xf32>
    %1 = vector.multi_reduction <add>, %0, %cst [0, 2] : vector<2x8x256xf32> to vector<8xf32>
    %2 = vector.shape_cast %1 : vector<8xf32> to vector<1x8x1xf32>
    %3 = arith.mulf %0, %0 : vector<2x8x256xf32>
    %cst_2 = arith.constant dense<0.000000e+00> : vector<8xf32>
    %4 = vector.multi_reduction <add>, %3, %cst_2 [0, 2] : vector<2x8x256xf32> to vector<8xf32>
    %5 = vector.shape_cast %4 : vector<8xf32> to vector<1x8x1xf32>
    %cst_3 = arith.constant 0.001953125 : f32
    %6 = vector.broadcast %cst_3 : f32 to vector<1x8x1xf32>
    %7 = arith.mulf %2, %6 : vector<1x8x1xf32>
    %cst_4 = arith.constant 0.001953125 : f32
    %8 = vector.broadcast %cst_4 : f32 to vector<1x8x1xf32>
    %9 = arith.mulf %5, %8 : vector<1x8x1xf32>
    %10 = arith.mulf %7, %7 : vector<1x8x1xf32>
    %11 = arith.subf %9, %10 : vector<1x8x1xf32>
    %cst_5 = arith.constant 0.000000e+00 : f32
    %12 = vector.broadcast %cst_5 : f32 to vector<1x8x1xf32>
    %13 = arith.maximumf %11, %12 : vector<1x8x1xf32>
    %cst_6 = arith.constant 9.99999974E-5 : f32
    %14 = vector.broadcast %cst_6 : f32 to vector<1x8x1xf32>
    %15 = arith.addf %13, %14 : vector<1x8x1xf32>
    %16 = math.rsqrt %15 : vector<1x8x1xf32>
    %c0_7 = arith.constant 0 : index
    %c0_8 = arith.constant 0 : index
    %c0_9 = arith.constant 0 : index
    %17 = vector.load %arg2[%c0_7, %c0_8, %c0_9] : memref<2x8x1xf32, #tpu.memory_space<vmem>>, vector<2x8x1xf32>
    %18 = vector.broadcast %16 : vector<1x8x1xf32> to vector<2x8x1xf32>
    %19 = arith.mulf %17, %18 : vector<2x8x1xf32>
    %c0_10 = arith.constant 0 : index
    %c0_11 = arith.constant 0 : index
    %c0_12 = arith.constant 0 : index
    %20 = vector.load %arg3[%c0_10, %c0_11, %c0_12] : memref<2x8x1xf32, #tpu.memory_space<vmem>>, vector<2x8x1xf32>
    %21 = vector.broadcast %7 : vector<1x8x1xf32> to vector<2x8x1xf32>
    %22 = arith.mulf %19, %21 : vector<2x8x1xf32>
    %23 = arith.subf %20, %22 : vector<2x8x1xf32>
    %24 = vector.broadcast %19 : vector<2x8x1xf32> to vector<2x8x256xf32>
    %25 = arith.mulf %0, %24 : vector<2x8x256xf32>
    %26 = vector.broadcast %23 : vector<2x8x1xf32> to vector<2x8x256xf32>
    %27 = arith.addf %25, %26 : vector<2x8x256xf32>
    %c0_13 = arith.constant 0 : index
    %c0_14 = arith.constant 0 : index
    %c0_15 = arith.constant 0 : index
    %28 = vector.load %arg4[%c0_13, %c0_14, %c0_15] : memref<2x8x256xf32, #tpu.memory_space<vmem>>, vector<2x8x256xf32>
    tpu.vector_store %arg4[%c0_13, %c0_14, %c0_15], %27 {strides = array<i32>} : memref<2x8x256xf32, #tpu.memory_space<vmem>>, vector<2x8x256xf32>,
    return
  }
  func.func @transform_0(%arg0: i32) -> (i32, i32, i32) {
    %c0_i32 = arith.constant 0 : i32
    %c0_i32_0 = arith.constant 0 : i32
    %c0_i32_1 = arith.constant 0 : i32
    return %c0_i32, %arg0, %c0_i32_0 : i32, i32, i32
  }
  func.func @transform_1(%arg0: i32) -> (i32, i32, i32) {
    %c0_i32 = arith.constant 0 : i32
    %c0_i32_0 = arith.constant 0 : i32
    %c0_i32_1 = arith.constant 0 : i32
    return %c0_i32, %arg0, %c0_i32_0 : i32, i32, i32
  }
  func.func @transform_2(%arg0: i32) -> (i32, i32, i32) {
    %c0_i32 = arith.constant 0 : i32
    %c0_i32_0 = arith.constant 0 : i32
    %c0_i32_1 = arith.constant 0 : i32
    return %c0_i32, %arg0, %c0_i32_0 : i32, i32, i32
  }
  func.func @transform_3(%arg0: i32) -> (i32, i32, i32) {
    %c0_i32 = arith.constant 0 : i32
    %c0_i32_0 = arith.constant 0 : i32
    %c0_i32_1 = arith.constant 0 : i32
    return %c0_i32, %arg0, %c0_i32_0 : i32, i32, i32
  }
}

</mosaic_0001>

<llo_original>
// kernel: tpu_custom_call.1
$region0: #{tpu_custom_call.1}
  #allocation0 [shape = 'u32[]', space=smem, size = 0x4, offset = 0x4, fixed_abs, tag = 'smem constant byte address 0x4 - core index']
  #allocation1 [shape = 'u32[144,128]{1,0:T(1,128)}', space=vmem, size = 0x12000, scoped, tag = 'internal scratch']
  %s0 = inlined_call_operand.vmem [shape: f32[2,8,256], index: 0, kind: input, shape index: {}]
  %s1 = inlined_call_operand.vmem [shape: f32[2,8,1], index: 1, kind: input, shape index: {}]
  %s2 = inlined_call_operand.vmem [shape: f32[2,8,1], index: 2, kind: input, shape index: {}]
  %s3 = inlined_call_operand.hbm [shape: f32[2,8,256], index: 3, kind: output, shape index: {}]
  %s4 = sld [smem:[#allocation0]]
  $region22: #{tpu_custom_call.1} parent=0
    _
  %s6 = ssub.s32 1, %s4
  %s7 = scalar_select 0, %s6, %s4
  $region1: #{tpu_custom_call.1} parent=0
    #allocation2 [shape = 'u8[16384]{0}', space=vmem, size = 0x4000, scoped, tag = 'output window, operand 0, single buffered']
    #allocation3 [shape = 's32[1]{0}', space=sflag, size = 0x4, scoped, tag = 'scoped memory for tpu_custom_call.1']
    %8 = vsyncpa [#allocation3], 0
    // Predicated region
    $region2: #{tpu_custom_call.1} parent=1 // pred_check
      _
    $region3: #{tpu_custom_call.1} parent=1 // pred_check_branch
      %10 = sbr.rel (0) target = $region5
    $region4: #{tpu_custom_call.1} parent=1 // pred_region
      _
    $region5: #{tpu_custom_call.1} parent=1 // pred_fallthru
      _
    // Predicated region
    $region6: #{tpu_custom_call.1} parent=1 // pred_check
      _
    $region7: #{tpu_custom_call.1} parent=1 // pred_check_branch
      %12 = sbr.rel (0) target = $region9
    $region8: #{tpu_custom_call.1} parent=1 // pred_region
      _
    $region9: #{tpu_custom_call.1} parent=1 // pred_fallthru
      _
    // Predicated region
    $region10: #{tpu_custom_call.1} parent=1 // pred_check
      _
    $region11: #{tpu_custom_call.1} parent=1 // pred_check_branch
      %14 = sbr.rel (0) target = $region13
    $region12: #{tpu_custom_call.1} parent=1 // pred_region
      _
    $region13: #{tpu_custom_call.1} parent=1 // pred_fallthru
      _
    %v15 = vld [vmem:[%s0] sm:$0xff]
    %v16 = vld [vmem:[%s0 + $0x8] sm:$0xff]
    %v17 = vld [vmem:[%s0 + $0x10] sm:$0xff]
    %v18 = vld [vmem:[%s0 + $0x18] sm:$0xff]
    %v19 = vadd.f32 %v15, %v16
    %v20 = vadd.f32 %v19, %v17
    %v21 = vadd.f32 %v20, %v18
    %22 = vadd.xlane.f32.xlu0 %v21
    %v23 = vpop.xlane.xlu0 %22
    %v24 = vmul.f32 %v15, %v15
    %v25 = vmul.f32 %v16, %v16
    %v26 = vmul.f32 %v17, %v17
    %v27 = vmul.f32 %v18, %v18
    %v28 = vadd.f32 %v24, %v25
    %v29 = vadd.f32 %v28, %v26
    %v30 = vadd.f32 %v29, %v27
    %31 = vadd.xlane.f32.xlu0 %v30
    %v32 = vpop.xlane.xlu0 %31
    %v33 = vmul.f32 %v23, 0.001953125
    %v34 = vmul.f32 %v32, 0.001953125
    %v35 = vmul.f32 %v33, %v33
    %v36 = vsub.f32 %v34, %v35
    %v37 = vmax.f32 %v36, 0.0
    %v38 = vadd.f32 %v37, 0.0001
    %v39 = vrsqrt.pop %v38
    %v40 = vld [vmem:[%s1] sm:$0xff]
    %v41 = vld [vmem:[%s1 + $0x8] sm:$0xff]
    %v42 = vmul.f32 %v40, %v39
    %v43 = vmul.f32 %v41, %v39
    %v44 = vld [vmem:[%s2] sm:$0xff]
    %v45 = vld [vmem:[%s2 + $0x8] sm:$0xff]
    %v46 = vmul.f32 %v42, %v33
    %v47 = vmul.f32 %v43, %v33
    %v48 = vsub.f32 %v44, %v46
    %v49 = vsub.f32 %v45, %v47
    %51 = vset.pattern.permute.xlu0 0
    %52 = vperm.xlu0 %51, %v42
    %v53 = vpop.permute.xlu0 %52
    %56 = vset.pattern.permute.xlu0 0
    %57 = vperm.xlu0 %56, %v43
    %v58 = vpop.permute.xlu0 %57
    %v60 = vmul.f32 %v15, %v53
    %v61 = vmul.f32 %v16, %v53
    %v62 = vmul.f32 %v17, %v58
    %v63 = vmul.f32 %v18, %v58
    %65 = vset.pattern.permute.xlu0 0
    %66 = vperm.xlu0 %65, %v48
    %v67 = vpop.permute.xlu0 %66
    %70 = vset.pattern.permute.xlu0 0
    %71 = vperm.xlu0 %70, %v49
    %v72 = vpop.permute.xlu0 %71
    %v74 = vadd.f32 %v60, %v67
    %v75 = vadd.f32 %v61, %v67
    %v76 = vadd.f32 %v62, %v72
    %v77 = vadd.f32 %v63, %v72
    %78 = vst [vmem:[#allocation2] sm:$0xff] %v74
    %79 = vst [vmem:[#allocation2 + $0x8] sm:$0xff] %v75
    %80 = vst [vmem:[#allocation2 + $0x10] sm:$0xff] %v76
    %81 = vst [vmem:[#allocation2 + $0x18] sm:$0xff] %v77
    // Predicated region
    $region14: #{tpu_custom_call.1} parent=1 // pred_check
      _
    $region15: #{tpu_custom_call.1} parent=1 // pred_check_branch
      %83 = sbr.rel (0) target = $region17
    $region16: #{tpu_custom_call.1} parent=1 // pred_region
      %s85 = ssub.s32 512, 512
      %86 = vsyncadd [#allocation3], %s85
      %s87 = sshll.u32 [#allocation2], 4
      %s88 = int_to_ptr.vmem [resolvable:$true] %s87
      %93 = dma.vmem_to_hbm [thread:$0]  %s88, 512, %s3, [#allocation3], 256, 256, 16
    $region17: #{tpu_custom_call.1} parent=1 // pred_fallthru
      _
    // Predicated region
    $region18: #{tpu_custom_call.1} parent=1 // pred_check
      _
    $region19: #{tpu_custom_call.1} parent=1 // pred_check_branch
      %95 = sbr.rel (0) target = $region21
    $region20: #{tpu_custom_call.1} parent=1 // pred_region
      %96 = dma.done [#allocation3], 512
    $region21: #{tpu_custom_call.1} parent=1 // pred_fallthru
      _
    %97 = vsyncpa [#allocation3], 1

</llo_original>
